<compile_context>
chip_gen: v6e
topology: v6e:2x2x1
jax: 0.10.0
libtpu: 0.0.40
codegen_flags: <defaults>
</compile_context>

<pallas_src>
import jax
import jax.numpy as jnp
from jax.experimental import pallas as pl
from jax.experimental.pallas import tpu as pltpu


# ---------------------------------------------------------------------------
# Kernel bodies
# ---------------------------------------------------------------------------
def _accumulate_x(w_ref, x_ref, acc_ref):
    """acc += sum_i w[k*xt + i] * x[:, i, :], f32, accumulated in registers."""
    xt = x_ref.shape[1]
    x_base = pl.program_id(2) * xt            # offset of this X block in the weight
    acc = acc_ref[...]
    for i in range(xt):                       # static unroll; xt capped by the tiler
        row = x_ref[:, i:i + 1, :]            # (bt, 1, yt) static sublane slice
        row = row.astype(jnp.float32)[:, 0, :]  # (bt, yt) f32 — only small temp live
        acc = acc + w_ref[x_base + i] * row   # SMEM scalar * vector: VPU only
    acc_ref[...] = acc


def _lilinear_kernel_bias(w_ref, b_ref, x_ref, o_ref, acc_ref):
    k = pl.program_id(2)

    @pl.when(k == 0)
    def _init():
        acc_ref[...] = jnp.zeros_like(acc_ref)

    _accumulate_x(w_ref, x_ref, acc_ref)

    @pl.when(k == pl.num_programs(2) - 1)
    def _finalize():
        o_ref[...] = (acc_ref[...] + b_ref[...].astype(jnp.float32)).astype(o_ref.dtype)


def _lilinear_kernel_nobias(w_ref, x_ref, o_ref, acc_ref):
    k = pl.program_id(2)

    @pl.when(k == 0)
    def _init():
        acc_ref[...] = jnp.zeros_like(acc_ref)

    _accumulate_x(w_ref, x_ref, acc_ref)

    @pl.when(k == pl.num_programs(2) - 1)
    def _finalize():
        o_ref[...] = acc_ref[...].astype(o_ref.dtype)


# ---------------------------------------------------------------------------
# Tile selection (byte/dtype-aware, contiguity-first)
# ---------------------------------------------------------------------------
_VMEM_TARGET_BYTES = 24 << 20   # working-set target; well under the 32 MiB scoped limit
_MAX_XT = 256                   # cap on the statically unrolled X loop per grid step
_MAX_UNROLL_VECOPS = 16384      # xt * (acc vregs) cap, bounds trace/compile time


def _divisor_candidates(n, step):
    """`n` itself plus multiples of `step` that divide `n`, descending."""
    cands = {n}
    d = step
    while d < n:
        if n % d == 0:
            cands.add(d)
        d += step
    return sorted(cands, reverse=True)


def _tile_bytes(bt, xt, yt, x_isz, out_isz, has_bias):
    x_bytes = 2 * bt * xt * yt * x_isz          # double-buffered x slab
    out_bytes = 2 * bt * yt * out_isz           # double-buffered output tile
    acc_bytes = bt * yt * 4                     # f32 accumulator scratch
    tmp_bytes = 2 * bt * yt * 4                 # live f32 row + register acc (approx)
    bias_bytes = 2 * yt * 4 if has_bias else 0
    return x_bytes + out_bytes + acc_bytes + tmp_bytes + bias_bytes


def _pick_tiles(B, X, Y, x_isz, out_isz, has_bias):
    bt_cands = _divisor_candidates(B, 8)        # out block: multiple of 8 or full B
    yt_cands = _divisor_candidates(Y, 128)      # lane-dense: multiple of 128 or full Y
    xt_all = _divisor_candidates(X, 8)          # x block: multiple of 8 or full X
    xt_cands = [d for d in xt_all if d <= _MAX_XT] or [xt_all[-1]]

    # Preference (perf review): keep yt == Y if at all possible (contiguous HBM
    # chunks per DMA), then grow xt (bigger chunks, fewer reduction revisits),
    # then grow bt.
    for yt in yt_cands:
        for xt in xt_cands:
            for bt in bt_cands:
                if (_tile_bytes(bt, xt, yt, x_isz, out_isz, has_bias) <= _VMEM_TARGET_BYTES
                        and xt * pl.cdiv(bt * yt, 1024) <= _MAX_UNROLL_VECOPS):
                    return bt, xt, yt
    # TODO(synk): nothing fits the budget (e.g. huge Y not divisible by 128, or
    # B not a multiple of 8); fall back to the smallest legal tile and let the
    # raised vmem limit absorb it.
    return bt_cands[-1], xt_cands[-1], yt_cands[-1]


def _ensure_parallel_split(B, Y, bt, yt):
    """Guarantee >= 2 steps on a 'parallel' grid axis when legal (v7x: 2 TCs)."""
    if (B // bt) * (Y // yt) >= 2:
        return bt, yt
    for cand in _divisor_candidates(B, 8):
        if cand < B:
            return cand, yt
    for cand in _divisor_candidates(Y, 128):
        if cand < Y:
            return bt, cand
    return bt, yt


# ---------------------------------------------------------------------------
# Wrapper
# ---------------------------------------------------------------------------
def lilinear(x, weight, bias=None, *, block_b=None, block_x=None, block_y=None):
    """LILinear forward. x: (B, X, Y), weight: (1, X), bias: (Y,) or None -> (B, 1, Y)."""
    B, X, Y = x.shape
    if weight.shape not in ((1, X), (X,)):
        raise ValueError(f"weight must have shape (1, {X}) or ({X},); got {weight.shape}")
    if bias is not None and bias.shape != (Y,):
        raise ValueError(f"bias must have shape ({Y},); got {bias.shape}")

    dtypes = [x.dtype, weight.dtype] + ([bias.dtype] if bias is not None else [])
    out_dtype = jnp.result_type(*dtypes)
    x_isz = jnp.dtype(x.dtype).itemsize
    out_isz = jnp.dtype(out_dtype).itemsize
    has_bias = bias is not None

    bt, xt, yt = _pick_tiles(B, X, Y, x_isz, out_isz, has_bias)
    if block_b is None and block_y is None:
        bt, yt = _ensure_parallel_split(B, Y, bt, yt)
    if block_b is not None:
        bt = int(block_b)
    if block_x is not None:
        xt = int(block_x)
    if block_y is not None:
        yt = int(block_y)
    for name, tile, full, align in (("block_b", bt, B, 8),
                                    ("block_x", xt, X, 8),
                                    ("block_y", yt, Y, 128)):
        if full % tile != 0:
            raise ValueError(f"{name}={tile} must divide the corresponding dim {full}")
        if tile != full and tile % align != 0:
            raise ValueError(f"{name}={tile} must be a multiple of {align} or the full dim")

    grid = (B // bt, Y // yt, X // xt)          # reduction (X) axis last / innermost

    # Weight goes to SMEM as a flat f32 vector; read back as scalars inside the
    # X loop (no (X, 1) VMEM block at 1/128 lane utilisation, no XLU reduce).
    w_vec = weight.reshape(X).astype(jnp.float32)

    w_spec = pl.BlockSpec(memory_space=pltpu.MemorySpace.SMEM)
    x_spec = pl.BlockSpec((bt, xt, yt), lambda i, j, k: (i, k, j))
    out_spec = pl.BlockSpec((bt, yt), lambda i, j, k: (i, j))   # lane-dense 2-D output

    est = _tile_bytes(bt, xt, yt, x_isz, out_isz, has_bias)
    vmem_limit = int(min(48 << 20, max(32 << 20, est + est // 4)))
    compiler_params = pltpu.CompilerParams(
        dimension_semantics=("parallel", "parallel", "arbitrary"),
        vmem_limit_bytes=vmem_limit,
    )
    scratch_shapes = [pltpu.VMEM((bt, yt), jnp.float32)]

    if bias is None:
        out2d = pl.pallas_call(
            _lilinear_kernel_nobias,
            out_shape=jax.ShapeDtypeStruct((B, Y), out_dtype),
            grid_spec=pltpu.PrefetchScalarGridSpec(
                num_scalar_prefetch=0,
                grid=grid,
                in_specs=[w_spec, x_spec],
                out_specs=out_spec,
                scratch_shapes=scratch_shapes,
            ),
            compiler_params=compiler_params,
        )(w_vec, x)
    else:
        b_row = bias.reshape(1, Y)              # promoted to f32 inside the kernel
        b_spec = pl.BlockSpec((1, yt), lambda i, j, k: (0, j))
        out2d = pl.pallas_call(
            _lilinear_kernel_bias,
            out_shape=jax.ShapeDtypeStruct((B, Y), out_dtype),
            grid_spec=pltpu.PrefetchScalarGridSpec(
                num_scalar_prefetch=0,
                grid=grid,
                in_specs=[w_spec, b_spec, x_spec],
                out_specs=out_spec,
                scratch_shapes=scratch_shapes,
            ),
            compiler_params=compiler_params,
        )(w_vec, b_row, x)

    return out2d.reshape(B, 1, Y)


def lilinear_ref(x, weight, bias=None):
    out = jnp.einsum("ox,bxy->boy", weight.astype(jnp.float32), x.astype(jnp.float32))
    if bias is not None:
        out = out + bias.astype(jnp.float32)[None, None, :]
    return out


if __name__ == "__main__":
    key = jax.random.PRNGKey(0)
    keys = jax.random.split(key, 10)

    # --- 1. Small shape matching the module's toy usage: in_size = (X, Y) ----
    B, X, Y = 2, 16, 32
    x = jax.random.normal(keys[0], (B, X, Y), dtype=jnp.float32)
    w_std = (2.0 / X) ** 0.5                       # kaiming_normal_ on (1, X): fan_in = X
    weight = w_std * jax.random.normal(keys[1], (1, X), dtype=jnp.float32)
    bias = jax.random.normal(keys[2], (Y,), dtype=jnp.float32)

    out = jax.block_until_ready(lilinear(x, weight, bias))
    ref = lilinear_ref(x, weight, bias)
    assert out.shape == (B, 1, Y), out.shape
    assert jnp.allclose(out, ref, atol=1e-5, rtol=1e-5), "bias path mismatch"

    # --- 2. Multi-step tiled grid (B and Y tiled), bias-free path ------------
    B2, X2, Y2 = 16, 8, 256
    x2 = jax.random.normal(keys[3], (B2, X2, Y2), dtype=jnp.float32)
    weight2 = (2.0 / X2) ** 0.5 * jax.random.normal(keys[4], (1, X2), dtype=jnp.float32)

    out2 = jax.block_until_ready(lilinear(x2, weight2, None, block_b=8, block_y=128))
    ref2 = lilinear_ref(x2, weight2, None)
    assert out2.shape == (B2, 1, Y2), out2.shape
    assert jnp.allclose(out2, ref2, atol=1e-5, rtol=1e-5), "no-bias tiled mismatch"

    # --- 3. X-tiled reduction path (accumulator across the 'arbitrary' axis) -
    B3, X3, Y3 = 8, 32, 128
    x3 = jax.random.normal(keys[5], (B3, X3, Y3), dtype=jnp.float32)
    weight3 = (2.0 / X3) ** 0.5 * jax.random.normal(keys[6], (1, X3), dtype=jnp.float32)
    bias3 = jax.random.normal(keys[7], (Y3,), dtype=jnp.float32)

    out3 = jax.block_until_ready(lilinear(x3, weight3, bias3, block_x=8))
    ref3 = lilinear_ref(x3, weight3, bias3)
    assert out3.shape == (B3, 1, Y3), out3.shape
    assert jnp.allclose(out3, ref3, atol=1e-5, rtol=1e-5), "x-tiled accumulator mismatch"

    # --- 4. bf16 inputs: f32 accumulation, bf16 output -----------------------
    B4, X4, Y4 = 8, 16, 128
    x4 = jax.random.normal(keys[8], (B4, X4, Y4), dtype=jnp.bfloat16)
    weight4 = ((2.0 / X4) ** 0.5 *
               jax.random.normal(keys[9], (1, X4), dtype=jnp.bfloat16))

    out4 = jax.block_until_ready(lilinear(x4, weight4, None))
    ref4 = lilinear_ref(x4, weight4, None)
    assert out4.shape == (B4, 1, Y4), out4.shape
    assert jnp.allclose(out4.astype(jnp.float32), ref4, atol=5e-2, rtol=5e-2), "bf16 mismatch"

    print("KERNEL_OK")
</pallas_src>

<mosaic_0001>
module attributes {stable_mosaic.version = 11 : i64} {
  func.func @_lilinear_kernel_bias(%arg0: i32, %arg1: i32, %arg2: i32, %arg3: memref<16xf32, #tpu.memory_space<smem>>, %arg4: memref<1x32xf32, #tpu.memory_space<vmem>>, %arg5: memref<2x16x32xf32, #tpu.memory_space<vmem>>, %arg6: memref<2x32xf32, #tpu.memory_space<vmem>>, %arg7: memref<2x32xf32, #tpu.memory_space<vmem>>) attributes {dimension_semantics = [#tpu.dimension_semantics<parallel>, #tpu.dimension_semantics<parallel>, #tpu.dimension_semantics<arbitrary>], iteration_bounds = array<i64: 1, 1, 1>, scalar_prefetch = 0 : i64, scratch_operands = 1 : i64, tpu.core_type = #tpu.core_type<tc>, window_params = [{transform_indices = @transform_0, window_bounds = array<i64: 16>}, {transform_indices = @transform_1, window_bounds = array<i64: 1, 32>}, {transform_indices = @transform_2, window_bounds = array<i64: 2, 16, 32>}, {transform_indices = @transform_3, window_bounds = array<i64: 2, 32>}]} {
    %c0_i32 = arith.constant 0 : i32
    %0 = arith.cmpi eq, %arg2, %c0_i32 : i32
    %1 = arith.extui %0 : i1 to i32
    %c0_i32_0 = arith.constant 0 : i32
    %2 = arith.cmpi ne, %1, %c0_i32_0 : i32
    scf.if %2 {
      %cst = arith.constant 0.000000e+00 : f32
      %137 = vector.broadcast %cst : f32 to vector<2x32xf32>
      %c0_40 = arith.constant 0 : index
      %c0_41 = arith.constant 0 : index
      %138 = vector.load %arg7[%c0_40, %c0_41] : memref<2x32xf32, #tpu.memory_space<vmem>>, vector<2x32xf32>
      tpu.vector_store %arg7[%c0_40, %c0_41], %137 {strides = array<i32>} : memref<2x32xf32, #tpu.memory_space<vmem>>, vector<2x32xf32>,
    } else {
    }
    %c16_i32 = arith.constant 16 : i32
    %3 = arith.muli %arg2, %c16_i32 : i32
    %c0 = arith.constant 0 : index
    %c0_1 = arith.constant 0 : index
    %4 = vector.load %arg7[%c0, %c0_1] : memref<2x32xf32, #tpu.memory_space<vmem>>, vector<2x32xf32>
    %c0_2 = arith.constant 0 : index
    %c0_3 = arith.constant 0 : index
    %c0_4 = arith.constant 0 : index
    %5 = vector.load %arg5[%c0_2, %c0_3, %c0_4] : memref<2x16x32xf32, #tpu.memory_space<vmem>>, vector<2x1x32xf32>
    %6 = vector.shape_cast %5 : vector<2x1x32xf32> to vector<2x32xf32>
    %c0_i32_5 = arith.constant 0 : i32
    %7 = arith.addi %3, %c0_i32_5 : i32
    %8 = arith.index_cast %7 : i32 to index
    %9 = memref.load %arg3[%8] : memref<16xf32, #tpu.memory_space<smem>>
    %10 = vector.broadcast %9 : f32 to vector<2x32xf32>
    %11 = arith.mulf %10, %6 : vector<2x32xf32>
    %12 = arith.addf %4, %11 : vector<2x32xf32>
    %c0_6 = arith.constant 0 : index
    %c1 = arith.constant 1 : index
    %c0_7 = arith.constant 0 : index
    %13 = vector.load %arg5[%c0_6, %c1, %c0_7] : memref<2x16x32xf32, #tpu.memory_space<vmem>>, vector<2x1x32xf32>
    %14 = vector.shape_cast %13 : vector<2x1x32xf32> to vector<2x32xf32>
    %c1_i32 = arith.constant 1 : i32
    %15 = arith.addi %3, %c1_i32 : i32
    %16 = arith.index_cast %15 : i32 to index
    %17 = memref.load %arg3[%16] : memref<16xf32, #tpu.memory_space<smem>>
    %18 = vector.broadcast %17 : f32 to vector<2x32xf32>
    %19 = arith.mulf %18, %14 : vector<2x32xf32>
    %20 = arith.addf %12, %19 : vector<2x32xf32>
    %c0_8 = arith.constant 0 : index
    %c2 = arith.constant 2 : index
    %c0_9 = arith.constant 0 : index
    %21 = vector.load %arg5[%c0_8, %c2, %c0_9] : memref<2x16x32xf32, #tpu.memory_space<vmem>>, vector<2x1x32xf32>
    %22 = vector.shape_cast %21 : vector<2x1x32xf32> to vector<2x32xf32>
    %c2_i32 = arith.constant 2 : i32
    %23 = arith.addi %3, %c2_i32 : i32
    %24 = arith.index_cast %23 : i32 to index
    %25 = memref.load %arg3[%24] : memref<16xf32, #tpu.memory_space<smem>>
    %26 = vector.broadcast %25 : f32 to vector<2x32xf32>
    %27 = arith.mulf %26, %22 : vector<2x32xf32>
    %28 = arith.addf %20, %27 : vector<2x32xf32>
    %c0_10 = arith.constant 0 : index
    %c3 = arith.constant 3 : index
    %c0_11 = arith.constant 0 : index
    %29 = vector.load %arg5[%c0_10, %c3, %c0_11] : memref<2x16x32xf32, #tpu.memory_space<vmem>>, vector<2x1x32xf32>
    %30 = vector.shape_cast %29 : vector<2x1x32xf32> to vector<2x32xf32>
    %c3_i32 = arith.constant 3 : i32
    %31 = arith.addi %3, %c3_i32 : i32
    %32 = arith.index_cast %31 : i32 to index
    %33 = memref.load %arg3[%32] : memref<16xf32, #tpu.memory_space<smem>>
    %34 = vector.broadcast %33 : f32 to vector<2x32xf32>
    %35 = arith.mulf %34, %30 : vector<2x32xf32>
    %36 = arith.addf %28, %35 : vector<2x32xf32>
    %c0_12 = arith.constant 0 : index
    %c4 = arith.constant 4 : index
    %c0_13 = arith.constant 0 : index
    %37 = vector.load %arg5[%c0_12, %c4, %c0_13] : memref<2x16x32xf32, #tpu.memory_space<vmem>>, vector<2x1x32xf32>
    %38 = vector.shape_cast %37 : vector<2x1x32xf32> to vector<2x32xf32>
    %c4_i32 = arith.constant 4 : i32
    %39 = arith.addi %3, %c4_i32 : i32
    %40 = arith.index_cast %39 : i32 to index
    %41 = memref.load %arg3[%40] : memref<16xf32, #tpu.memory_space<smem>>
    %42 = vector.broadcast %41 : f32 to vector<2x32xf32>
    %43 = arith.mulf %42, %38 : vector<2x32xf32>
    %44 = arith.addf %36, %43 : vector<2x32xf32>
    %c0_14 = arith.constant 0 : index
    %c5 = arith.constant 5 : index
    %c0_15 = arith.constant 0 : index
    %45 = vector.load %arg5[%c0_14, %c5, %c0_15] : memref<2x16x32xf32, #tpu.memory_space<vmem>>, vector<2x1x32xf32>
    %46 = vector.shape_cast %45 : vector<2x1x32xf32> to vector<2x32xf32>
    %c5_i32 = arith.constant 5 : i32
    %47 = arith.addi %3, %c5_i32 : i32
    %48 = arith.index_cast %47 : i32 to index
    %49 = memref.load %arg3[%48] : memref<16xf32, #tpu.memory_space<smem>>
    %50 = vector.broadcast %49 : f32 to vector<2x32xf32>
    %51 = arith.mulf %50, %46 : vector<2x32xf32>
    %52 = arith.addf %44, %51 : vector<2x32xf32>
    %c0_16 = arith.constant 0 : index
    %c6 = arith.constant 6 : index
    %c0_17 = arith.constant 0 : index
    %53 = vector.load %arg5[%c0_16, %c6, %c0_17] : memref<2x16x32xf32, #tpu.memory_space<vmem>>, vector<2x1x32xf32>
    %54 = vector.shape_cast %53 : vector<2x1x32xf32> to vector<2x32xf32>
    %c6_i32 = arith.constant 6 : i32
    %55 = arith.addi %3, %c6_i32 : i32
    %56 = arith.index_cast %55 : i32 to index
    %57 = memref.load %arg3[%56] : memref<16xf32, #tpu.memory_space<smem>>
    %58 = vector.broadcast %57 : f32 to vector<2x32xf32>
    %59 = arith.mulf %58, %54 : vector<2x32xf32>
    %60 = arith.addf %52, %59 : vector<2x32xf32>
    %c0_18 = arith.constant 0 : index
    %c7 = arith.constant 7 : index
    %c0_19 = arith.constant 0 : index
    %61 = vector.load %arg5[%c0_18, %c7, %c0_19] : memref<2x16x32xf32, #tpu.memory_space<vmem>>, vector<2x1x32xf32>
    %62 = vector.shape_cast %61 : vector<2x1x32xf32> to vector<2x32xf32>
    %c7_i32 = arith.constant 7 : i32
    %63 = arith.addi %3, %c7_i32 : i32
    %64 = arith.index_cast %63 : i32 to index
    %65 = memref.load %arg3[%64] : memref<16xf32, #tpu.memory_space<smem>>
    %66 = vector.broadcast %65 : f32 to vector<2x32xf32>
    %67 = arith.mulf %66, %62 : vector<2x32xf32>
    %68 = arith.addf %60, %67 : vector<2x32xf32>
    %c0_20 = arith.constant 0 : index
    %c8 = arith.constant 8 : index
    %c0_21 = arith.constant 0 : index
    %69 = vector.load %arg5[%c0_20, %c8, %c0_21] : memref<2x16x32xf32, #tpu.memory_space<vmem>>, vector<2x1x32xf32>
    %70 = vector.shape_cast %69 : vector<2x1x32xf32> to vector<2x32xf32>
    %c8_i32 = arith.constant 8 : i32
    %71 = arith.addi %3, %c8_i32 : i32
    %72 = arith.index_cast %71 : i32 to index
    %73 = memref.load %arg3[%72] : memref<16xf32, #tpu.memory_space<smem>>
    %74 = vector.broadcast %73 : f32 to vector<2x32xf32>
    %75 = arith.mulf %74, %70 : vector<2x32xf32>
    %76 = arith.addf %68, %75 : vector<2x32xf32>
    %c0_22 = arith.constant 0 : index
    %c9 = arith.constant 9 : index
    %c0_23 = arith.constant 0 : index
    %77 = vector.load %arg5[%c0_22, %c9, %c0_23] : memref<2x16x32xf32, #tpu.memory_space<vmem>>, vector<2x1x32xf32>
    %78 = vector.shape_cast %77 : vector<2x1x32xf32> to vector<2x32xf32>
    %c9_i32 = arith.constant 9 : i32
    %79 = arith.addi %3, %c9_i32 : i32
    %80 = arith.index_cast %79 : i32 to index
    %81 = memref.load %arg3[%80] : memref<16xf32, #tpu.memory_space<smem>>
    %82 = vector.broadcast %81 : f32 to vector<2x32xf32>
    %83 = arith.mulf %82, %78 : vector<2x32xf32>
    %84 = arith.addf %76, %83 : vector<2x32xf32>
    %c0_24 = arith.constant 0 : index
    %c10 = arith.constant 10 : index
    %c0_25 = arith.constant 0 : index
    %85 = vector.load %arg5[%c0_24, %c10, %c0_25] : memref<2x16x32xf32, #tpu.memory_space<vmem>>, vector<2x1x32xf32>
    %86 = vector.shape_cast %85 : vector<2x1x32xf32> to vector<2x32xf32>
    %c10_i32 = arith.constant 10 : i32
    %87 = arith.addi %3, %c10_i32 : i32
    %88 = arith.index_cast %87 : i32 to index
    %89 = memref.load %arg3[%88] : memref<16xf32, #tpu.memory_space<smem>>
    %90 = vector.broadcast %89 : f32 to vector<2x32xf32>
    %91 = arith.mulf %90, %86 : vector<2x32xf32>
    %92 = arith.addf %84, %91 : vector<2x32xf32>
    %c0_26 = arith.constant 0 : index
    %c11 = arith.constant 11 : index
    %c0_27 = arith.constant 0 : index
    %93 = vector.load %arg5[%c0_26, %c11, %c0_27] : memref<2x16x32xf32, #tpu.memory_space<vmem>>, vector<2x1x32xf32>
    %94 = vector.shape_cast %93 : vector<2x1x32xf32> to vector<2x32xf32>
    %c11_i32 = arith.constant 11 : i32
    %95 = arith.addi %3, %c11_i32 : i32
    %96 = arith.index_cast %95 : i32 to index
    %97 = memref.load %arg3[%96] : memref<16xf32, #tpu.memory_space<smem>>
    %98 = vector.broadcast %97 : f32 to vector<2x32xf32>
    %99 = arith.mulf %98, %94 : vector<2x32xf32>
    %100 = arith.addf %92, %99 : vector<2x32xf32>
    %c0_28 = arith.constant 0 : index
    %c12 = arith.constant 12 : index
    %c0_29 = arith.constant 0 : index
    %101 = vector.load %arg5[%c0_28, %c12, %c0_29] : memref<2x16x32xf32, #tpu.memory_space<vmem>>, vector<2x1x32xf32>
    %102 = vector.shape_cast %101 : vector<2x1x32xf32> to vector<2x32xf32>
    %c12_i32 = arith.constant 12 : i32
    %103 = arith.addi %3, %c12_i32 : i32
    %104 = arith.index_cast %103 : i32 to index
    %105 = memref.load %arg3[%104] : memref<16xf32, #tpu.memory_space<smem>>
    %106 = vector.broadcast %105 : f32 to vector<2x32xf32>
    %107 = arith.mulf %106, %102 : vector<2x32xf32>
    %108 = arith.addf %100, %107 : vector<2x32xf32>
    %c0_30 = arith.constant 0 : index
    %c13 = arith.constant 13 : index
    %c0_31 = arith.constant 0 : index
    %109 = vector.load %arg5[%c0_30, %c13, %c0_31] : memref<2x16x32xf32, #tpu.memory_space<vmem>>, vector<2x1x32xf32>
    %110 = vector.shape_cast %109 : vector<2x1x32xf32> to vector<2x32xf32>
    %c13_i32 = arith.constant 13 : i32
    %111 = arith.addi %3, %c13_i32 : i32
    %112 = arith.index_cast %111 : i32 to index
    %113 = memref.load %arg3[%112] : memref<16xf32, #tpu.memory_space<smem>>
    %114 = vector.broadcast %113 : f32 to vector<2x32xf32>
    %115 = arith.mulf %114, %110 : vector<2x32xf32>
    %116 = arith.addf %108, %115 : vector<2x32xf32>
    %c0_32 = arith.constant 0 : index
    %c14 = arith.constant 14 : index
    %c0_33 = arith.constant 0 : index
    %117 = vector.load %arg5[%c0_32, %c14, %c0_33] : memref<2x16x32xf32, #tpu.memory_space<vmem>>, vector<2x1x32xf32>
    %118 = vector.shape_cast %117 : vector<2x1x32xf32> to vector<2x32xf32>
    %c14_i32 = arith.constant 14 : i32
    %119 = arith.addi %3, %c14_i32 : i32
    %120 = arith.index_cast %119 : i32 to index
    %121 = memref.load %arg3[%120] : memref<16xf32, #tpu.memory_space<smem>>
    %122 = vector.broadcast %121 : f32 to vector<2x32xf32>
    %123 = arith.mulf %122, %118 : vector<2x32xf32>
    %124 = arith.addf %116, %123 : vector<2x32xf32>
    %c0_34 = arith.constant 0 : index
    %c15 = arith.constant 15 : index
    %c0_35 = arith.constant 0 : index
    %125 = vector.load %arg5[%c0_34, %c15, %c0_35] : memref<2x16x32xf32, #tpu.memory_space<vmem>>, vector<2x1x32xf32>
    %126 = vector.shape_cast %125 : vector<2x1x32xf32> to vector<2x32xf32>
    %c15_i32 = arith.constant 15 : i32
    %127 = arith.addi %3, %c15_i32 : i32
    %128 = arith.index_cast %127 : i32 to index
    %129 = memref.load %arg3[%128] : memref<16xf32, #tpu.memory_space<smem>>
    %130 = vector.broadcast %129 : f32 to vector<2x32xf32>
    %131 = arith.mulf %130, %126 : vector<2x32xf32>
    %132 = arith.addf %124, %131 : vector<2x32xf32>
    %c0_36 = arith.constant 0 : index
    %c0_37 = arith.constant 0 : index
    %133 = vector.load %arg7[%c0_36, %c0_37] : memref<2x32xf32, #tpu.memory_space<vmem>>, vector<2x32xf32>
    tpu.vector_store %arg7[%c0_36, %c0_37], %132 {strides = array<i32>} : memref<2x32xf32, #tpu.memory_space<vmem>>, vector<2x32xf32>,
    %c0_i32_38 = arith.constant 0 : i32
    %134 = arith.cmpi eq, %arg2, %c0_i32_38 : i32
    %135 = arith.extui %134 : i1 to i32
    %c0_i32_39 = arith.constant 0 : i32
    %136 = arith.cmpi ne, %135, %c0_i32_39 : i32
    scf.if %136 {
      %c0_40 = arith.constant 0 : index
      %c0_41 = arith.constant 0 : index
      %137 = vector.load %arg7[%c0_40, %c0_41] : memref<2x32xf32, #tpu.memory_space<vmem>>, vector<2x32xf32>
      %c0_42 = arith.constant 0 : index
      %c0_43 = arith.constant 0 : index
      %138 = vector.load %arg4[%c0_42, %c0_43] : memref<1x32xf32, #tpu.memory_space<vmem>>, vector<1x32xf32>
      %139 = vector.broadcast %138 : vector<1x32xf32> to vector<2x32xf32>
      %140 = arith.addf %137, %139 : vector<2x32xf32>
      %c0_44 = arith.constant 0 : index
      %c0_45 = arith.constant 0 : index
      %141 = vector.load %arg6[%c0_44, %c0_45] : memref<2x32xf32, #tpu.memory_space<vmem>>, vector<2x32xf32>
      tpu.vector_store %arg6[%c0_44, %c0_45], %140 {strides = array<i32>} : memref<2x32xf32, #tpu.memory_space<vmem>>, vector<2x32xf32>,
    } else {
    }
    return
  }
  func.func @transform_0(%arg0: i32, %arg1: i32, %arg2: i32) -> i32 {
    %c0_i32 = arith.constant 0 : i32
    %c0_i32_0 = arith.constant 0 : i32
    return %c0_i32 : i32
  }
  func.func @transform_1(%arg0: i32, %arg1: i32, %arg2: i32) -> (i32, i32) {
    %c0_i32 = arith.constant 0 : i32
    %c0_i32_0 = arith.constant 0 : i32
    return %c0_i32, %arg1 : i32, i32
  }
  func.func @transform_2(%arg0: i32, %arg1: i32, %arg2: i32) -> (i32, i32, i32) {
    %c0_i32 = arith.constant 0 : i32
    return %arg0, %arg2, %arg1 : i32, i32, i32
  }
  func.func @transform_3(%arg0: i32, %arg1: i32, %arg2: i32) -> (i32, i32) {
    %c0_i32 = arith.constant 0 : i32
    return %arg0, %arg1 : i32, i32
  }
}

</mosaic_0001>

<llo_original>
// kernel: tpu_custom_call.1
$region0: #{tpu_custom_call.1}
  #allocation0 [shape = 'u32[]', space=smem, size = 0x4, offset = 0x4, fixed_abs, tag = 'smem constant byte address 0x4 - core index']
  #allocation1 [shape = 'u32[144,128]{1,0:T(1,128)}', space=vmem, size = 0x12000, scoped, tag = 'internal scratch']
  #allocation2 [shape = 'f32[2,32]{1,0:T(2,128)}', space=vmem, size = 0x400, scoped, tag = 'scratch operand']
  %s0 = inlined_call_operand.hbm [shape: f32[16], index: 0, kind: input, shape index: {}]
  %s1 = inlined_call_operand.vmem [shape: f32[1,32], index: 1, kind: input, shape index: {}]
  %s2 = inlined_call_operand.hbm [shape: f32[2,16,32], index: 2, kind: input, shape index: {}]
  %s3 = inlined_call_operand.hbm [shape: f32[2,32], index: 3, kind: output, shape index: {}]
  %s4 = sld [smem:[#allocation0]]
  $region38: #{tpu_custom_call.1} parent=0
    _
  %s6 = ssub.s32 1, %s4
  %s7 = scalar_select 0, %s6, %s4
  $region1: #{tpu_custom_call.1} parent=0
    #allocation3 [shape = 'u8[512]{0}', space=smem, size = 0x200, scoped, tag = 'input window, operand 0, single buffered']
    #allocation4 [shape = 's32[1]{0}', space=sflag, size = 0x4, scoped, tag = 'scoped memory for tpu_custom_call.1']
    #allocation5 [shape = 's32[1]{0}', space=sflag, size = 0x4, scoped, tag = 'scoped memory for tpu_custom_call.1']
    #allocation6 [shape = 's32[1]{0}', space=sflag, size = 0x4, scoped, tag = 'scoped memory for tpu_custom_call.1']
    #allocation7 [shape = 'u8[16384]{0}', space=vmem, size = 0x4000, scoped, tag = 'input window, operand 2, single buffered']
    #allocation8 [shape = 'u8[1024]{0}', space=vmem, size = 0x400, scoped, tag = 'output window, operand 0, single buffered']
    %8 = vsyncpa [#allocation6], 0
    %9 = vsyncpa [#allocation4], 0
    %10 = vsyncpa [#allocation5], 0
    // Predicated region
    $region2: #{tpu_custom_call.1} parent=1 // pred_check
      _
    $region3: #{tpu_custom_call.1} parent=1 // pred_check_branch
      %12 = sbr.rel (0) target = $region5
    $region4: #{tpu_custom_call.1} parent=1 // pred_region
      %s14 = ssub.s32 16, 16
      %15 = vsyncadd [#allocation6], %s14
      %18 = dma.hbm_to_smem %s0, 16, [#allocation3], [#allocation6]
    $region5: #{tpu_custom_call.1} parent=1 // pred_fallthru
      _
    // Predicated region
    $region6: #{tpu_custom_call.1} parent=1 // pred_check
      _
    $region7: #{tpu_custom_call.1} parent=1 // pred_check_branch
      %20 = sbr.rel (0) target = $region9
    $region8: #{tpu_custom_call.1} parent=1 // pred_region
      _
    $region9: #{tpu_custom_call.1} parent=1 // pred_fallthru
      _
    // Predicated region
    $region10: #{tpu_custom_call.1} parent=1 // pred_check
      _
    $region11: #{tpu_custom_call.1} parent=1 // pred_check_branch
      %22 = sbr.rel (0) target = $region13
    $region12: #{tpu_custom_call.1} parent=1 // pred_region
      %s24 = ssub.s32 512, 512
      %25 = vsyncadd [#allocation4], %s24
      %s26 = sshll.u32 [#allocation7], 4
      %s27 = int_to_ptr.vmem [resolvable:$true] %s26
      %32 = dma.hbm_to_vmem [thread:$0]  %s2, 512, %s27, [#allocation4], 128, 128, 8
    $region13: #{tpu_custom_call.1} parent=1 // pred_fallthru
      _
    // Predicated region
    $region14: #{tpu_custom_call.1} parent=1 // pred_check
      _
    $region15: #{tpu_custom_call.1} parent=1 // pred_check_branch
      %34 = sbr.rel (0) target = $region17
    $region16: #{tpu_custom_call.1} parent=1 // pred_region
      %35 = dma.done [#allocation6], 16
    $region17: #{tpu_custom_call.1} parent=1 // pred_fallthru
      _
    // Predicated region
    $region18: #{tpu_custom_call.1} parent=1 // pred_check
      _
    $region19: #{tpu_custom_call.1} parent=1 // pred_check_branch
      %37 = sbr.rel (0) target = $region21
    $region20: #{tpu_custom_call.1} parent=1 // pred_region
      %38 = dma.done [#allocation4], 512
    $region21: #{tpu_custom_call.1} parent=1 // pred_fallthru
      _
    %39 = sfence
    %p40 = scmp.eq.s32.totalorder 0, 0
    // Predicated region
    $region22: #{tpu_custom_call.1} parent=1 // pred_check
      %p41 = pneg %p40
    $region23: #{tpu_custom_call.1} parent=1 // pred_check_branch
      %43 = sbr.rel (%p41) target = $region25
    $region24: #{tpu_custom_call.1} parent=1 // pred_region
      %vm44 = vcmask 254976
      %45 = vst.msk [vmem:[#allocation2] sm:$0x3] %vm44, 0.0
    $region25: #{tpu_custom_call.1} parent=1 // pred_fallthru
      _
    %s46 = smul.u32 0, 16
    %v47 = vld [vmem:[#allocation2] sm:$0x3]
    %v48 = vld [vmem:[#allocation7] sm:$0x1]
    %v49 = vld [vmem:[#allocation7 + $0x10] sm:$0x1]
    %s50 = sld [smem:[#allocation3 + %s46]]
    %v51 = vstv %s50
    %v52 = vmul.f32 %v51, %v48
    %v53 = vmul.f32 %v51, %v49
    %v56 = vrot.slane %v53, 7
    %vm57 = vcmask 1041409
    %v58 = vsel %vm57, %v56, %v52
    %v60 = vadd.f32 %v47, %v58
    %v61 = vld [vmem:[#allocation7 + $0x1] sm:$0x1]
    %v62 = vld [vmem:[#allocation7 + $0x11] sm:$0x1]
    %s63 = sadd.s32 %s46, 1
    %s64 = sld [smem:[#allocation3 + %s63]]
    %v65 = vstv %s64
    %v66 = vmul.f32 %v65, %v61
    %v67 = vmul.f32 %v65, %v62
    %v70 = vrot.slane %v67, 7
    %v71 = vsel %vm57, %v70, %v66
    %v73 = vadd.f32 %v60, %v71
    %v74 = vld [vmem:[#allocation7 + $0x2] sm:$0x1]
    %v75 = vld [vmem:[#allocation7 + $0x12] sm:$0x1]
    %s76 = sadd.s32 %s46, 2
    %s77 = sld [smem:[#allocation3 + %s76]]
    %v78 = vstv %s77
    %v79 = vmul.f32 %v78, %v74
    %v80 = vmul.f32 %v78, %v75
    %v83 = vrot.slane %v80, 7
    %v84 = vsel %vm57, %v83, %v79
    %v86 = vadd.f32 %v73, %v84
    %v87 = vld [vmem:[#allocation7 + $0x3] sm:$0x1]
    %v88 = vld [vmem:[#allocation7 + $0x13] sm:$0x1]
    %s89 = sadd.s32 %s46, 3
    %s90 = sld [smem:[#allocation3 + %s89]]
    %v91 = vstv %s90
    %v92 = vmul.f32 %v91, %v87
    %v93 = vmul.f32 %v91, %v88
    %v96 = vrot.slane %v93, 7
    %v97 = vsel %vm57, %v96, %v92
    %v99 = vadd.f32 %v86, %v97
    %v100 = vld [vmem:[#allocation7 + $0x4] sm:$0x1]
    %v101 = vld [vmem:[#allocation7 + $0x14] sm:$0x1]
    %s102 = sadd.s32 %s46, 4
    %s103 = sld [smem:[#allocation3 + %s102]]
    %v104 = vstv %s103
    %v105 = vmul.f32 %v104, %v100
    %v106 = vmul.f32 %v104, %v101
    %v109 = vrot.slane %v106, 7
    %v110 = vsel %vm57, %v109, %v105
    %v112 = vadd.f32 %v99, %v110
    %v113 = vld [vmem:[#allocation7 + $0x5] sm:$0x1]
    %v114 = vld [vmem:[#allocation7 + $0x15] sm:$0x1]
    %s115 = sadd.s32 %s46, 5
    %s116 = sld [smem:[#allocation3 + %s115]]
    %v117 = vstv %s116
    %v118 = vmul.f32 %v117, %v113
    %v119 = vmul.f32 %v117, %v114
    %v122 = vrot.slane %v119, 7
    %v123 = vsel %vm57, %v122, %v118
    %v125 = vadd.f32 %v112, %v123
    %v126 = vld [vmem:[#allocation7 + $0x6] sm:$0x1]
    %v127 = vld [vmem:[#allocation7 + $0x16] sm:$0x1]
    %s128 = sadd.s32 %s46, 6
    %s129 = sld [smem:[#allocation3 + %s128]]
    %v130 = vstv %s129
    %v131 = vmul.f32 %v130, %v126
    %v132 = vmul.f32 %v130, %v127
    %v135 = vrot.slane %v132, 7
    %v136 = vsel %vm57, %v135, %v131
    %v138 = vadd.f32 %v125, %v136
    %v139 = vld [vmem:[#allocation7 + $0x7] sm:$0x1]
    %v140 = vld [vmem:[#allocation7 + $0x17] sm:$0x1]
    %s141 = sadd.s32 %s46, 7
    %s142 = sld [smem:[#allocation3 + %s141]]
    %v143 = vstv %s142
    %v144 = vmul.f32 %v143, %v139
    %v145 = vmul.f32 %v143, %v140
    %v148 = vrot.slane %v145, 7
    %v149 = vsel %vm57, %v148, %v144
    %v151 = vadd.f32 %v138, %v149
    %v152 = vld [vmem:[#allocation7 + $0x8] sm:$0x1]
    %v153 = vld [vmem:[#allocation7 + $0x18] sm:$0x1]
    %s154 = sadd.s32 %s46, 8
    %s155 = sld [smem:[#allocation3 + %s154]]
    %v156 = vstv %s155
    %v157 = vmul.f32 %v156, %v152
    %v158 = vmul.f32 %v156, %v153
    %v161 = vrot.slane %v158, 7
    %v162 = vsel %vm57, %v161, %v157
    %v164 = vadd.f32 %v151, %v162
    %v165 = vld [vmem:[#allocation7 + $0x9] sm:$0x1]
    %v166 = vld [vmem:[#allocation7 + $0x19] sm:$0x1]
    %s167 = sadd.s32 %s46, 9
    %s168 = sld [smem:[#allocation3 + %s167]]
    %v169 = vstv %s168
    %v170 = vmul.f32 %v169, %v165
    %v171 = vmul.f32 %v169, %v166
    %v174 = vrot.slane %v171, 7
    %v175 = vsel %vm57, %v174, %v170
    %v177 = vadd.f32 %v164, %v175
    %v178 = vld [vmem:[#allocation7 + $0xa] sm:$0x1]
    %v179 = vld [vmem:[#allocation7 + $0x1a] sm:$0x1]
    %s180 = sadd.s32 %s46, 10
    %s181 = sld [smem:[#allocation3 + %s180]]
    %v182 = vstv %s181
    %v183 = vmul.f32 %v182, %v178
    %v184 = vmul.f32 %v182, %v179
    %v187 = vrot.slane %v184, 7
    %v188 = vsel %vm57, %v187, %v183
    %v190 = vadd.f32 %v177, %v188
    %v191 = vld [vmem:[#allocation7 + $0xb] sm:$0x1]
    %v192 = vld [vmem:[#allocation7 + $0x1b] sm:$0x1]
    %s193 = sadd.s32 %s46, 11
    %s194 = sld [smem:[#allocation3 + %s193]]
    %v195 = vstv %s194
    %v196 = vmul.f32 %v195, %v191
    %v197 = vmul.f32 %v195, %v192
    %v200 = vrot.slane %v197, 7
    %v201 = vsel %vm57, %v200, %v196
    %v203 = vadd.f32 %v190, %v201
    %v204 = vld [vmem:[#allocation7 + $0xc] sm:$0x1]
    %v205 = vld [vmem:[#allocation7 + $0x1c] sm:$0x1]
    %s206 = sadd.s32 %s46, 12
    %s207 = sld [smem:[#allocation3 + %s206]]
    %v208 = vstv %s207
    %v209 = vmul.f32 %v208, %v204
    %v210 = vmul.f32 %v208, %v205
    %v213 = vrot.slane %v210, 7
    %v214 = vsel %vm57, %v213, %v209
    %v216 = vadd.f32 %v203, %v214
    %v217 = vld [vmem:[#allocation7 + $0xd] sm:$0x1]
    %v218 = vld [vmem:[#allocation7 + $0x1d] sm:$0x1]
    %s219 = sadd.s32 %s46, 13
    %s220 = sld [smem:[#allocation3 + %s219]]
    %v221 = vstv %s220
    %v222 = vmul.f32 %v221, %v217
    %v223 = vmul.f32 %v221, %v218
    %v226 = vrot.slane %v223, 7
    %v227 = vsel %vm57, %v226, %v222
    %v229 = vadd.f32 %v216, %v227
    %v230 = vld [vmem:[#allocation7 + $0xe] sm:$0x1]
    %v231 = vld [vmem:[#allocation7 + $0x1e] sm:$0x1]
    %s232 = sadd.s32 %s46, 14
    %s233 = sld [smem:[#allocation3 + %s232]]
    %v234 = vstv %s233
    %v235 = vmul.f32 %v234, %v230
    %v236 = vmul.f32 %v234, %v231
    %v239 = vrot.slane %v236, 7
    %v240 = vsel %vm57, %v239, %v235
    %v242 = vadd.f32 %v229, %v240
    %v243 = vld [vmem:[#allocation7 + $0xf] sm:$0x1]
    %v244 = vld [vmem:[#allocation7 + $0x1f] sm:$0x1]
    %s245 = sadd.s32 %s46, 15
    %s246 = sld [smem:[#allocation3 + %s245]]
    %v247 = vstv %s246
    %v248 = vmul.f32 %v247, %v243
    %v249 = vmul.f32 %v247, %v244
    %v252 = vrot.slane %v249, 7
    %v253 = vsel %vm57, %v252, %v248
    %v255 = vadd.f32 %v242, %v253
    %vm256 = vcmask 254976
    %257 = vst.msk [vmem:[#allocation2] sm:$0x3] %vm256, %v255
    // Predicated region
    $region26: #{tpu_custom_call.1} parent=1 // pred_check
      %p258 = pneg %p40
    $region27: #{tpu_custom_call.1} parent=1 // pred_check_branch
      %260 = sbr.rel (%p258) target = $region29
    $region28: #{tpu_custom_call.1} parent=1 // pred_region
      %v261 = vld [vmem:[#allocation2] sm:$0x3]
      %v262 = vld [vmem:[%s1] sm:$0x1]
      %v264 = vlaneseq
      %v265 = vshrl.u32 %v264, 7
      %v266 = vsub.s32 0, %v265
      %v267 = vrot.slane %v262, %v266
      %v269 = vadd.f32 %v261, %v267
      %270 = vst.msk [vmem:[#allocation8] sm:$0x3] %vm256, %v269
    $region29: #{tpu_custom_call.1} parent=1 // pred_fallthru
      _
    // Predicated region
    $region30: #{tpu_custom_call.1} parent=1 // pred_check
      _
    $region31: #{tpu_custom_call.1} parent=1 // pred_check_branch
      %272 = sbr.rel (0) target = $region33
    $region32: #{tpu_custom_call.1} parent=1 // pred_region
      %s274 = ssub.s32 32, 32
      %275 = vsyncadd [#allocation5], %s274
      %s277 = sshll.u32 [#allocation8], 4
      %s278 = int_to_ptr.vmem [resolvable:$true] %s277
      %280 = dma.vmem_to_hbm [thread:$0]  %s278, 32, %s3, [#allocation5]
    $region33: #{tpu_custom_call.1} parent=1 // pred_fallthru
      _
    // Predicated region
    $region34: #{tpu_custom_call.1} parent=1 // pred_check
      _
    $region35: #{tpu_custom_call.1} parent=1 // pred_check_branch
      %282 = sbr.rel (0) target = $region37
    $region36: #{tpu_custom_call.1} parent=1 // pred_region
      %283 = dma.done [#allocation5], 32
    $region37: #{tpu_custom_call.1} parent=1 // pred_fallthru
      _
    %284 = vsyncpa [#allocation4], 1
    %285 = vsyncpa [#allocation5], 1
    %286 = vsyncpa [#allocation6], 1

</llo_original>
